<compile_context>
chip_gen: v7x
topology: tpu7x:2x2x1
jax: 0.10.0
libtpu: 0.0.40
codegen_flags: <defaults>
</compile_context>

<pallas_src>
import functools

import jax
import jax.numpy as jnp
from jax import lax
from jax.experimental import pallas as pl
from jax.experimental.pallas import tpu as pltpu


def _supcon_kernel(temperature, base_temperature, tq, B,
                   frow_ref, fall_ref, lab_col_ref, lab_row_ref,
                   loss_ref, valid_ref, acc_ref):
    # Grid position: read ONCE at the top level (never inside a pl.when body).
    i = pl.program_id(0)
    k = pl.program_id(1)
    nk = pl.num_programs(1)
    row_base = i * tq  # traced scalar; safe to capture inside pl.when branches

    @pl.when(k == 0)
    def _():
        acc_ref[...] = jnp.zeros_like(acc_ref)

    # (tq, tk) . (B, tk)^T -> (tq, B); bf16 operands, f32 accumulate on the MXU.
    acc_ref[...] += lax.dot_general(
        frow_ref[...], fall_ref[...],
        dimension_numbers=(((1,), (1,)), ((), ())),
        preferred_element_type=jnp.float32)

    @pl.when(k == nk - 1)
    def _():
        inv_t = jnp.float32(1.0 / temperature)
        logits = acc_ref[...] * inv_t                             # (tq, B) f32

        # global row/col ids -> off-diagonal predicate (identity mask folded
        # into the label mask; no (B,B) f32 logits_mask temporary).
        row_ids = row_base + lax.broadcasted_iota(jnp.int32, (tq, B), 0)
        col_ids = lax.broadcasted_iota(jnp.int32, (tq, B), 1)
        off_diag = row_ids != col_ids

        lab_c = lab_col_ref[...]                                  # (tq, 1) int32
        lab_r = lab_row_ref[...]                                  # (1, B) int32
        mask = jnp.where((lab_c == lab_r) & off_diag, 1.0, 0.0)   # (tq, B) f32

        # numerically stable log-softmax; the row max includes the diagonal,
        # matching the PyTorch reference.
        logits_max = jnp.max(logits, axis=1, keepdims=True)
        logits = logits - logits_max
        exp_logits = jnp.where(off_diag, jnp.exp(logits), 0.0)
        log_denom = jnp.log(jnp.sum(exp_logits, axis=1, keepdims=True))
        log_prob = logits - log_denom

        mask_sum = jnp.sum(mask, axis=1, keepdims=True)           # (tq, 1)
        valid = mask_sum > 0.0
        mean_log_prob_pos = (jnp.sum(mask * log_prob, axis=1, keepdims=True)
                             / jnp.where(valid, mask_sum, 1.0))

        scale = jnp.float32(temperature / base_temperature)
        loss_ref[...] = jnp.where(valid, -scale * mean_log_prob_pos, 0.0)
        valid_ref[...] = valid.astype(jnp.float32)


def supcon_loss(features, labels, temperature=0.07, base_temperature=0.07,
                block_q=None, block_k=None):
    """features: (B, D) float, labels: (B,) int. Returns scalar loss.

    block_q / block_k (optional): row / contraction tile sizes. Defaults keep
    the whole array as one tile, which is right for small B, D. For large D
    pick block_k (multiple of 128; 256 on v6e/v7x) to stream the contraction;
    for large B pick block_q to shard rows across TensorCores and bound VMEM.
    """
    B, D = features.shape
    feat = features.astype(jnp.bfloat16)          # bf16 operands, f32 MXU accumulate
    lab_col = labels.astype(jnp.int32).reshape(B, 1)
    lab_row = labels.astype(jnp.int32).reshape(1, B)

    tq = B if block_q is None else min(block_q, B)
    tk = D if block_k is None else min(block_k, D)
    assert B % tq == 0 and D % tk == 0
    assert tq == B or tq % 8 == 0
    assert tk == D or tk % 128 == 0

    grid = (B // tq, D // tk)
    kernel = functools.partial(_supcon_kernel, temperature, base_temperature, tq, B)

    loss_rows, valid_rows = pl.pallas_call(
        kernel,
        out_shape=(jax.ShapeDtypeStruct((B, 1), jnp.float32),
                   jax.ShapeDtypeStruct((B, 1), jnp.float32)),
        grid_spec=pltpu.PrefetchScalarGridSpec(
            num_scalar_prefetch=0,
            grid=grid,
            in_specs=[
                pl.BlockSpec((tq, tk), lambda i, k: (i, k)),   # row tile of features
                pl.BlockSpec((B, tk), lambda i, k: (0, k)),    # all rows, same K slice
                pl.BlockSpec((tq, 1), lambda i, k: (i, 0)),    # labels (column)
                pl.BlockSpec((1, B), lambda i, k: (0, 0)),     # labels (row)
            ],
            out_specs=(
                pl.BlockSpec((tq, 1), lambda i, k: (i, 0)),
                pl.BlockSpec((tq, 1), lambda i, k: (i, 0)),
            ),
            scratch_shapes=[pltpu.VMEM((tq, B), jnp.float32)],
        ),
        compiler_params=pltpu.CompilerParams(
            dimension_semantics=("parallel", "arbitrary")),
    )(feat, feat, lab_col, lab_row)

    n_valid = jnp.sum(valid_rows)
    loss_sum = jnp.sum(loss_rows)
    # guard the degenerate "no row has a positive" case (PyTorch ref would NaN)
    return jnp.where(n_valid > 0, loss_sum / jnp.maximum(n_valid, 1.0), 0.0)


def _supcon_loss_ref(features, labels, temperature=0.07, base_temperature=0.07):
    # pure-JAX reference mirroring the PyTorch module, on the same bf16-quantized
    # features the kernel sees (so the only difference is f32 accumulation order).
    f = features.astype(jnp.bfloat16).astype(jnp.float32)
    B = f.shape[0]
    lab = labels.reshape(-1, 1)
    mask = (lab == lab.T).astype(jnp.float32)
    dot = jnp.dot(f, f.T, precision=lax.Precision.HIGHEST) / temperature
    logits = dot - jnp.max(dot, axis=1, keepdims=True)
    logits_mask = 1.0 - jnp.eye(B, dtype=jnp.float32)
    mask = mask * logits_mask
    exp_logits = jnp.exp(logits) * logits_mask
    log_prob = logits - jnp.log(exp_logits.sum(1, keepdims=True))
    s = mask.sum(1)
    valid = s > 0
    mlpp = (mask * log_prob).sum(1) / jnp.where(valid, s, 1.0)
    loss = -(temperature / base_temperature) * mlpp
    return jnp.sum(jnp.where(valid, loss, 0.0)) / jnp.sum(valid.astype(jnp.float32))


if __name__ == "__main__":
    key = jax.random.PRNGKey(0)
    kf, kl = jax.random.split(key)
    B, D = 8, 32
    features = jax.random.normal(kf, (B, D), dtype=jnp.float32)
    # L2-normalize like typical SupCon usage (not required by the module, but realistic)
    features = features / jnp.linalg.norm(features, axis=1, keepdims=True)
    labels = jax.random.randint(kl, (B,), 0, 3, dtype=jnp.int32)

    loss = supcon_loss(features, labels)
    loss = jax.block_until_ready(loss)

    ref = _supcon_loss_ref(features, labels)
    assert jnp.allclose(loss, ref, rtol=1e-4, atol=1e-4), (loss, ref)
    print("KERNEL_OK")
</pallas_src>

<mosaic_0001>
module attributes {stable_mosaic.version = 11 : i64} {
  func.func @_supcon_kernel(%arg0: i32, %arg1: i32, %arg2: memref<8x32xbf16, #tpu.memory_space<vmem>>, %arg3: memref<8x32xbf16, #tpu.memory_space<vmem>>, %arg4: memref<8x1xi32, #tpu.memory_space<vmem>>, %arg5: memref<1x8xi32, #tpu.memory_space<vmem>>, %arg6: memref<8x1xf32, #tpu.memory_space<vmem>>, %arg7: memref<8x1xf32, #tpu.memory_space<vmem>>, %arg8: memref<8x8xf32, #tpu.memory_space<vmem>>) attributes {dimension_semantics = [#tpu.dimension_semantics<parallel>, #tpu.dimension_semantics<arbitrary>], iteration_bounds = array<i64: 1, 1>, scalar_prefetch = 0 : i64, scratch_operands = 1 : i64, tpu.core_type = #tpu.core_type<tc>, window_params = [{transform_indices = @transform_0, window_bounds = array<i64: 8, 32>}, {transform_indices = @transform_1, window_bounds = array<i64: 8, 32>}, {transform_indices = @transform_2, window_bounds = array<i64: 8, 1>}, {pipeline_mode = #tpu.pipeline_mode<synchronous>, transform_indices = @transform_3, window_bounds = array<i64: 1, 8>}, {transform_indices = @transform_4, window_bounds = array<i64: 8, 1>}, {transform_indices = @transform_5, window_bounds = array<i64: 8, 1>}]} {
    %c8_i32 = arith.constant 8 : i32
    %0 = arith.muli %arg0, %c8_i32 : i32
    %c0_i32 = arith.constant 0 : i32
    %1 = arith.cmpi eq, %arg1, %c0_i32 : i32
    %2 = arith.extui %1 : i1 to i32
    %c0_i32_0 = arith.constant 0 : i32
    %3 = arith.cmpi ne, %2, %c0_i32_0 : i32
    scf.if %3 {
      %cst_10 = arith.constant 0.000000e+00 : f32
      %13 = vector.broadcast %cst_10 : f32 to vector<8x8xf32>
      %c0_11 = arith.constant 0 : index
      %c0_12 = arith.constant 0 : index
      %14 = vector.load %arg8[%c0_11, %c0_12] : memref<8x8xf32, #tpu.memory_space<vmem>>, vector<8x8xf32>
      tpu.vector_store %arg8[%c0_11, %c0_12], %13 {strides = array<i32>} : memref<8x8xf32, #tpu.memory_space<vmem>>, vector<8x8xf32>,
    } else {
    }
    %c0 = arith.constant 0 : index
    %c0_1 = arith.constant 0 : index
    %4 = vector.load %arg8[%c0, %c0_1] : memref<8x8xf32, #tpu.memory_space<vmem>>, vector<8x8xf32>
    %c0_2 = arith.constant 0 : index
    %c0_3 = arith.constant 0 : index
    %5 = vector.load %arg2[%c0_2, %c0_3] : memref<8x32xbf16, #tpu.memory_space<vmem>>, vector<8x32xbf16>
    %c0_4 = arith.constant 0 : index
    %c0_5 = arith.constant 0 : index
    %6 = vector.load %arg3[%c0_4, %c0_5] : memref<8x32xbf16, #tpu.memory_space<vmem>>, vector<8x32xbf16>
    %cst = arith.constant dense<0.000000e+00> : vector<8x8xf32>
    %7 = tpu.matmul %5, %6, %cst {dimension_numbers = #tpu.dot_dimension_numbers<[1], [1], [0], [0], [0, 0, 1, 0], [], []>} : vector<8x32xbf16>, vector<8x32xbf16>, vector<8x8xf32> -> vector<8x8xf32>
    %8 = arith.addf %4, %7 : vector<8x8xf32>
    %c0_6 = arith.constant 0 : index
    %c0_7 = arith.constant 0 : index
    %9 = vector.load %arg8[%c0_6, %c0_7] : memref<8x8xf32, #tpu.memory_space<vmem>>, vector<8x8xf32>
    tpu.vector_store %arg8[%c0_6, %c0_7], %8 {strides = array<i32>} : memref<8x8xf32, #tpu.memory_space<vmem>>, vector<8x8xf32>,
    %c0_i32_8 = arith.constant 0 : i32
    %10 = arith.cmpi eq, %arg1, %c0_i32_8 : i32
    %11 = arith.extui %10 : i1 to i32
    %c0_i32_9 = arith.constant 0 : i32
    %12 = arith.cmpi ne, %11, %c0_i32_9 : i32
    scf.if %12 {
      %c0_10 = arith.constant 0 : index
      %c0_11 = arith.constant 0 : index
      %13 = vector.load %arg8[%c0_10, %c0_11] : memref<8x8xf32, #tpu.memory_space<vmem>>, vector<8x8xf32>
      %cst_12 = arith.constant 14.2857141 : f32
      %14 = vector.broadcast %cst_12 : f32 to vector<8x8xf32>
      %15 = arith.mulf %13, %14 : vector<8x8xf32>
      %16 = tpu.iota {dimensions = array<i32: 0>} : vector<8x8xi32>
      %17 = vector.broadcast %0 : i32 to vector<8x8xi32>
      %18 = arith.addi %17, %16 : vector<8x8xi32>
      %19 = tpu.iota {dimensions = array<i32: 1>} : vector<8x8xi32>
      %20 = arith.cmpi ne, %18, %19 : vector<8x8xi32>
      %c0_13 = arith.constant 0 : index
      %c0_14 = arith.constant 0 : index
      %21 = vector.load %arg4[%c0_13, %c0_14] : memref<8x1xi32, #tpu.memory_space<vmem>>, vector<8x1xi32>
      %c0_15 = arith.constant 0 : index
      %c0_16 = arith.constant 0 : index
      %22 = vector.load %arg5[%c0_15, %c0_16] : memref<1x8xi32, #tpu.memory_space<vmem>>, vector<1x8xi32>
      %23 = vector.broadcast %21 : vector<8x1xi32> to vector<8x8xi32>
      %24 = vector.broadcast %22 : vector<1x8xi32> to vector<8x8xi32>
      %25 = arith.cmpi eq, %23, %24 : vector<8x8xi32>
      %26 = arith.andi %25, %20 : vector<8x8xi1>
      %cst_17 = arith.constant 1.000000e+00 : f32
      %cst_18 = arith.constant 0.000000e+00 : f32
      %27 = vector.broadcast %cst_17 : f32 to vector<8x8xf32>
      %28 = vector.broadcast %cst_18 : f32 to vector<8x8xf32>
      %29 = arith.select %26, %27, %28 : vector<8x8xi1>, vector<8x8xf32>
      %cst_19 = arith.constant dense<0xFF800000> : vector<8xf32>
      %30 = vector.multi_reduction <maximumf>, %15, %cst_19 [1] : vector<8x8xf32> to vector<8xf32>
      %31 = vector.shape_cast %30 : vector<8xf32> to vector<8x1xf32>
      %32 = vector.broadcast %31 : vector<8x1xf32> to vector<8x8xf32>
      %33 = arith.subf %15, %32 : vector<8x8xf32>
      %34 = math.exp %33 : vector<8x8xf32>
      %cst_20 = arith.constant 0.000000e+00 : f32
      %35 = vector.broadcast %cst_20 : f32 to vector<8x8xf32>
      %36 = arith.select %20, %34, %35 : vector<8x8xi1>, vector<8x8xf32>
      %cst_21 = arith.constant dense<0.000000e+00> : vector<8xf32>
      %37 = vector.multi_reduction <add>, %36, %cst_21 [1] : vector<8x8xf32> to vector<8xf32>
      %38 = vector.shape_cast %37 : vector<8xf32> to vector<8x1xf32>
      %39 = math.log %38 : vector<8x1xf32>
      %40 = vector.broadcast %39 : vector<8x1xf32> to vector<8x8xf32>
      %41 = arith.subf %33, %40 : vector<8x8xf32>
      %cst_22 = arith.constant dense<0.000000e+00> : vector<8xf32>
      %42 = vector.multi_reduction <add>, %29, %cst_22 [1] : vector<8x8xf32> to vector<8xf32>
      %43 = vector.shape_cast %42 : vector<8xf32> to vector<8x1xf32>
      %cst_23 = arith.constant 0.000000e+00 : f32
      %44 = vector.broadcast %cst_23 : f32 to vector<8x1xf32>
      %45 = arith.cmpf ogt, %43, %44 : vector<8x1xf32>
      %46 = arith.mulf %29, %41 : vector<8x8xf32>
      %cst_24 = arith.constant dense<0.000000e+00> : vector<8xf32>
      %47 = vector.multi_reduction <add>, %46, %cst_24 [1] : vector<8x8xf32> to vector<8xf32>
      %48 = vector.shape_cast %47 : vector<8xf32> to vector<8x1xf32>
      %cst_25 = arith.constant 1.000000e+00 : f32
      %49 = vector.broadcast %cst_25 : f32 to vector<8x1xf32>
      %50 = arith.select %45, %43, %49 : vector<8x1xi1>, vector<8x1xf32>
      %51 = arith.divf %48, %50 : vector<8x1xf32>
      %cst_26 = arith.constant 0.000000e+00 : f32
      %cst_27 = arith.constant 1.000000e+00 : f32
      %52 = arith.subf %cst_26, %cst_27 : f32
      %53 = vector.broadcast %52 : f32 to vector<8x1xf32>
      %54 = arith.mulf %53, %51 : vector<8x1xf32>
      %cst_28 = arith.constant 0.000000e+00 : f32
      %55 = vector.broadcast %cst_28 : f32 to vector<8x1xf32>
      %56 = arith.select %45, %54, %55 : vector<8x1xi1>, vector<8x1xf32>
      %c0_29 = arith.constant 0 : index
      %c0_30 = arith.constant 0 : index
      %57 = vector.load %arg6[%c0_29, %c0_30] : memref<8x1xf32, #tpu.memory_space<vmem>>, vector<8x1xf32>
      tpu.vector_store %arg6[%c0_29, %c0_30], %56 {strides = array<i32>} : memref<8x1xf32, #tpu.memory_space<vmem>>, vector<8x1xf32>,
      %58 = arith.extui %45 : vector<8x1xi1> to vector<8x1xi32>
      %59 = arith.sitofp %58 : vector<8x1xi32> to vector<8x1xf32>
      %c0_31 = arith.constant 0 : index
      %c0_32 = arith.constant 0 : index
      %60 = vector.load %arg7[%c0_31, %c0_32] : memref<8x1xf32, #tpu.memory_space<vmem>>, vector<8x1xf32>
      tpu.vector_store %arg7[%c0_31, %c0_32], %59 {strides = array<i32>} : memref<8x1xf32, #tpu.memory_space<vmem>>, vector<8x1xf32>,
    } else {
    }
    return
  }
  func.func @transform_0(%arg0: i32, %arg1: i32) -> (i32, i32) {
    %c0_i32 = arith.constant 0 : i32
    return %arg0, %arg1 : i32, i32
  }
  func.func @transform_1(%arg0: i32, %arg1: i32) -> (i32, i32) {
    %c0_i32 = arith.constant 0 : i32
    %c0_i32_0 = arith.constant 0 : i32
    return %c0_i32, %arg1 : i32, i32
  }
  func.func @transform_2(%arg0: i32, %arg1: i32) -> (i32, i32) {
    %c0_i32 = arith.constant 0 : i32
    %c0_i32_0 = arith.constant 0 : i32
    return %arg0, %c0_i32 : i32, i32
  }
  func.func @transform_3(%arg0: i32, %arg1: i32) -> (i32, i32) {
    %c0_i32 = arith.constant 0 : i32
    %c0_i32_0 = arith.constant 0 : i32
    %c0_i32_1 = arith.constant 0 : i32
    return %c0_i32, %c0_i32_0 : i32, i32
  }
  func.func @transform_4(%arg0: i32, %arg1: i32) -> (i32, i32) {
    %c0_i32 = arith.constant 0 : i32
    %c0_i32_0 = arith.constant 0 : i32
    return %arg0, %c0_i32 : i32, i32
  }
  func.func @transform_5(%arg0: i32, %arg1: i32) -> (i32, i32) {
    %c0_i32 = arith.constant 0 : i32
    %c0_i32_0 = arith.constant 0 : i32
    return %arg0, %c0_i32 : i32, i32
  }
}

</mosaic_0001>

<llo_original>
// kernel: tpu_custom_call.1
$region0: #{tpu_custom_call.1}
  #allocation0 [shape = 'u32[]', space=smem, size = 0x4, offset = 0x4, fixed_abs, tag = 'smem constant byte address 0x4 - core index']
  #allocation1 [shape = 'u32[144,128]{1,0:T(1,128)}', space=vmem, size = 0x12000, scoped, tag = 'internal scratch']
  #allocation2 [shape = 'f32[8,8]{1,0:T(8,128)}', space=vmem, size = 0x1000, scoped, tag = 'scratch operand']
  %s0 = inlined_call_operand.vmem [shape: bf16[8,32], index: 0, kind: input, shape index: {}]
  %s1 = inlined_call_operand.vmem [shape: bf16[8,32], index: 1, kind: input, shape index: {}]
  %s2 = inlined_call_operand.vmem [shape: s32[8,1], index: 2, kind: input, shape index: {}]
  %s3 = inlined_call_operand.vmem [shape: s32[1,8], index: 3, kind: input, shape index: {}]
  %s4 = inlined_call_operand.vmem [shape: f32[8,1], index: 4, kind: output, shape index: {0}]
  %s5 = inlined_call_operand.vmem [shape: f32[8,1], index: 5, kind: output, shape index: {1}]
  %6 = xla_tuple %s4, %s5
  %s7 = sld [smem:[#allocation0]]
  $region42: #{tpu_custom_call.1} parent=0
    _
  %s9 = ssub.s32 1, %s7
  %s10 = scalar_select 0, %s9, %s7
  // Predicated region
  $region2: #{tpu_custom_call.1} parent=0 // pred_check
    _
  $region3: #{tpu_custom_call.1} parent=0 // pred_check_branch
    %12 = sbr.rel (0) target = $region5
  $region4: #{tpu_custom_call.1} parent=0 // pred_region
    _
  $region5: #{tpu_custom_call.1} parent=0 // pred_fallthru
    _
  // Predicated region
  $region6: #{tpu_custom_call.1} parent=0 // pred_check
    _
  $region7: #{tpu_custom_call.1} parent=0 // pred_check_branch
    %14 = sbr.rel (0) target = $region9
  $region8: #{tpu_custom_call.1} parent=0 // pred_region
    _
  $region9: #{tpu_custom_call.1} parent=0 // pred_fallthru
    _
  // Predicated region
  $region10: #{tpu_custom_call.1} parent=0 // pred_check
    _
  $region11: #{tpu_custom_call.1} parent=0 // pred_check_branch
    %16 = sbr.rel (0) target = $region13
  $region12: #{tpu_custom_call.1} parent=0 // pred_region
    _
  $region13: #{tpu_custom_call.1} parent=0 // pred_fallthru
    _
  // Predicated region
  $region14: #{tpu_custom_call.1} parent=0 // pred_check
    _
  $region15: #{tpu_custom_call.1} parent=0 // pred_check_branch
    %18 = sbr.rel (0) target = $region17
  $region16: #{tpu_custom_call.1} parent=0 // pred_region
    _
  $region17: #{tpu_custom_call.1} parent=0 // pred_fallthru
    _
  %s20 = smul.u32 0, 8
  %p21 = scmp.eq.s32.totalorder 0, 0
  // Predicated region
  $region18: #{tpu_custom_call.1} parent=0 // pred_check
    %p22 = pneg %p21
  $region19: #{tpu_custom_call.1} parent=0 // pred_check_branch
    %24 = sbr.rel (%p22) target = $region21
  $region20: #{tpu_custom_call.1} parent=0 // pred_region
    %vm25 = vcmask 64512
    %26 = vst.msk [vmem:[#allocation2] sm:$0xff] %vm25, 0.0
  $region21: #{tpu_custom_call.1} parent=0 // pred_fallthru
    _
  %v27 = vld [vmem:[#allocation2] sm:$0xff]
  %v28 = vld [vmem:[%s0] sm:$0xf]
  %v29 = vld [vmem:[%s1] sm:$0xf]
  %vm30 = vcmask 261120
  %v32 = vsel %vm30, %v28, 0
  %v35 = vsel %vm30, %v29, 0
  %37 = vmatprep.subr.bf16.mxu0 0
  %38 = vmatpush1.bf16.xpose.msra.mxu0 %v35
  %39 = vmatprep.subr.bf16.mxu0 0
  %40 = vmatpush1.bf16.xpose.msra.mxu0 0
  %41 = vmatprep.subr.bf16.mxu0 0
  %42 = vmatpush1.bf16.xpose.msra.mxu0 0
  %43 = vmatprep.subr.bf16.mxu0 0
  %44 = vmatpush1.bf16.xpose.msra.mxu0 0
  %45 = vmatprep.subr.bf16.mxu0 0
  %46 = vmatpush1.bf16.xpose.msra.mxu0 0
  %47 = vmatprep.subr.bf16.mxu0 0
  %48 = vmatpush1.bf16.xpose.msra.mxu0 0
  %49 = vmatprep.subr.bf16.mxu0 0
  %50 = vmatpush1.bf16.xpose.msra.mxu0 0
  %51 = vmatprep.subr.bf16.mxu0 0
  %52 = vmatpush1.bf16.xpose.msra.mxu0 0
  %53 = vmatprep.subr.bf16.mxu0 0
  %54 = vmatpush1.bf16.xpose.msra.mxu0 0
  %55 = vmatprep.subr.bf16.mxu0 0
  %56 = vmatpush1.bf16.xpose.msra.mxu0 0
  %57 = vmatprep.subr.bf16.mxu0 0
  %58 = vmatpush1.bf16.xpose.msra.mxu0 0
  %59 = vmatprep.subr.bf16.mxu0 0
  %60 = vmatpush1.bf16.xpose.msra.mxu0 0
  %61 = vmatprep.subr.bf16.mxu0 0
  %62 = vmatpush1.bf16.xpose.msra.mxu0 0
  %63 = vmatprep.subr.bf16.mxu0 0
  %64 = vmatpush1.bf16.xpose.msra.mxu0 0
  %65 = vmatprep.subr.bf16.mxu0 0
  %66 = vmatpush1.bf16.xpose.msra.mxu0 0
  %67 = vmatprep.subr.bf16.mxu0 0
  %68 = vmatpush1.bf16.xpose.msra.mxu0 0
  %69 = vmatprep.mubr.bf16.mxu0 0
  %70 = vmatmul.mubr.bf16.gmra.mrb[0].mxu0 %v32
  %v71 = vpop.f32.mrb[0].mxu0
  %v72 = vadd.f32 0.0, %v71
  %v73 = vpop.f32.mrb[0].mxu0
  %v74 = vpop.f32.mrb[0].mxu0
  %v75 = vpop.f32.mrb[0].mxu0
  %76 = vdwg.mxu0
  %v77 = vadd.f32 %v27, %v72
  %vm78 = vcmask 64512
  %79 = vst.msk [vmem:[#allocation2] sm:$0xff] %vm78, %v77
  // Predicated region
  $region22: #{tpu_custom_call.1} parent=0 // pred_check
    %p80 = pneg %p21
  $region23: #{tpu_custom_call.1} parent=0 // pred_check_branch
    %82 = sbr.rel (%p80) target = $region25
  $region24: #{tpu_custom_call.1} parent=0 // pred_region
    %v83 = vld [vmem:[#allocation2] sm:$0xff]
    %v84 = vmul.f32 %v83, 14.285714
    %v85 = vlaneseq
    %v86 = vshrl.u32 %v85, 7
    %v87 = vstv %s20
    %v88 = vadd.s32 %v87, %v86
    %v89 = vlaneseq
    %v90 = vand.u32 %v89, 127
    %vm91 = vcmp.ne.s32.totalorder %v88, %v90
    %v92 = vld [vmem:[%s2] sm:$0xff]
    %v93 = vld [vmem:[%s3] sm:$0x1]
    %94 = vset.pattern.permute.xlu0 0
    %95 = vperm.xlu0 %94, %v92
    %v96 = vpop.permute.xlu0 %95
    %v97 = vlaneseq
    %v98 = vshrl.u32 %v97, 7
    %v99 = vsub.s32 0, %v98
    %v100 = vrot.slane %v93, %v99
    %vm101 = vcmp.eq.s32.totalorder %v96, %v100
    %vm102 = vmand %vm101, %vm91
    %v103 = vsel %vm102, 1.0, 0.0
    %v104 = vsel %vm78, %v84, -inf
    %105 = vmax.xlane.f32.xlu0 %v104
    %v106 = vpop.xlane.xlu0 %105
    %v107 = vsub.f32 %v84, %v106
    %v108 = vmul.f32 %v107, 1.442695
    %v109 = vpow.pop %v108
    %v110 = vsel %vm91, %v109, 0.0
    %v111 = vsel %vm78, %v110, 0.0
    %112 = vadd.xlane.f32.xlu0 %v111
    %v113 = vpop.xlane.xlu0 %112
    %v114 = vlog2.pop %v113
    %v115 = vmul.f32 %v114, 0.6931472
    %v116 = vsub.f32 %v107, %v115
    %v117 = vsel %vm78, %v103, 0.0
    %118 = vadd.xlane.f32.xlu0 %v117
    %v119 = vpop.xlane.xlu0 %118
    %vm120 = vcmp.gt.f32.partialorder %v119, 0.0
    %v121 = vmul.f32 %v103, %v116
    %v122 = vsel %vm78, %v121, 0.0
    %123 = vadd.xlane.f32.xlu0 %v122
    %v124 = vpop.xlane.xlu0 %123
    %v125 = vsel %vm120, %v119, 1.0
    %v126 = vrcp.pop %v125
    %v127 = vmul.f32 %v124, %v126
    %v128 = vmul.f32 %v127, -1.0
    %v129 = vsel %vm120, %v128, 0.0
    %vm130 = vcmask 7168
    %131 = vst.msk [vmem:[%s4] sm:$0xff] %vm130, %v129
    %v132 = vsel %vm120, 1, 0
    %v133 = vcvt.s32.f32 %v132
    %134 = vst.msk [vmem:[%s5] sm:$0xff] %vm130, %v133
  $region25: #{tpu_custom_call.1} parent=0 // pred_fallthru
    _
  // Predicated region
  $region26: #{tpu_custom_call.1} parent=0 // pred_check
    _
  $region27: #{tpu_custom_call.1} parent=0 // pred_check_branch
    %136 = sbr.rel (0) target = $region29
  $region28: #{tpu_custom_call.1} parent=0 // pred_region
    _
  $region29: #{tpu_custom_call.1} parent=0 // pred_fallthru
    _
  // Predicated region
  $region30: #{tpu_custom_call.1} parent=0 // pred_check
    _
  $region31: #{tpu_custom_call.1} parent=0 // pred_check_branch
    %138 = sbr.rel (0) target = $region33
  $region32: #{tpu_custom_call.1} parent=0 // pred_region
    _
  $region33: #{tpu_custom_call.1} parent=0 // pred_fallthru
    _
  // Predicated region
  $region34: #{tpu_custom_call.1} parent=0 // pred_check
    _
  $region35: #{tpu_custom_call.1} parent=0 // pred_check_branch
    %140 = sbr.rel (0) target = $region37
  $region36: #{tpu_custom_call.1} parent=0 // pred_region
    _
  $region37: #{tpu_custom_call.1} parent=0 // pred_fallthru
    _
  // Predicated region
  $region38: #{tpu_custom_call.1} parent=0 // pred_check
    _
  $region39: #{tpu_custom_call.1} parent=0 // pred_check_branch
    %142 = sbr.rel (0) target = $region41
  $region40: #{tpu_custom_call.1} parent=0 // pred_region
    _
  $region41: #{tpu_custom_call.1} parent=0 // pred_fallthru
    _

</llo_original>
